<compile_context>
chip_gen: v7x
topology: tpu7x:2x2x1
jax: 0.10.0
libtpu: 0.0.40
codegen_flags: <defaults>
</compile_context>

<pallas_src>
import numpy as np
import jax
import jax.numpy as jnp
from jax.experimental import pallas as pl
from jax.experimental.pallas import tpu as pltpu


def _round_up(x, m):
    return ((x + m - 1) // m) * m


# ----------------------------------------------------------------------------
# Pallas kernel: one (TM, TN) tile of the pairwise L-inf cost matrix
# ----------------------------------------------------------------------------
def _cost_tile_kernel(d0_ref, d1_ref, cost_ref):
    # d0_ref : (TM, 2)  point-major slice of dgm0 (col 0 = birth, col 1 = death)
    #          (last-dim padding to 128 lanes is accepted: the block is tiny
    #           relative to the (TM, TN) cost tile)
    # d1_ref : (2, TN)  coordinate-major slice of dgm1 (row 0 = birth, row 1 = death)
    b0 = d0_ref[:, 0:1]          # (TM, 1)
    e0 = d0_ref[:, 1:2]          # (TM, 1)
    b1 = d1_ref[0:1, :]          # (1, TN)
    e1 = d1_ref[1:2, :]          # (1, TN)
    # Cross L-inf distance between every point of the dgm0 slice and dgm1 slice.
    cost_ref[...] = jnp.maximum(jnp.abs(b0 - b1), jnp.abs(e0 - e1))


def _pairwise_linf_cost(d0_pad, d1t_pad, tm, tn):
    npad = d0_pad.shape[0]
    mpad = d1t_pad.shape[1]
    grid = (npad // tm, mpad // tn)
    return pl.pallas_call(
        _cost_tile_kernel,
        out_shape=jax.ShapeDtypeStruct((npad, mpad), jnp.float32),
        grid=grid,
        in_specs=[
            pl.BlockSpec((tm, 2), lambda i, j: (i, 0)),
            pl.BlockSpec((2, tn), lambda i, j: (0, j)),
        ],
        out_specs=pl.BlockSpec((tm, tn), lambda i, j: (i, j)),
        compiler_params=pltpu.CompilerParams(
            dimension_semantics=("parallel", "parallel")),
    )(d0_pad, d1t_pad)


# ----------------------------------------------------------------------------
# Host-side glue (dynamic-shape filtering + combinatorial matching)
# ----------------------------------------------------------------------------
def _remove_zero_bars(dgm):
    dgm = np.asarray(dgm, dtype=np.float32)
    if dgm.size == 0:
        return dgm.reshape(0, 2)
    return dgm[dgm[:, 0] != dgm[:, 1]]


def _has_perfect_matching(adj_ok):
    """Kuhn's augmenting-path maximum bipartite matching on a boolean adjacency."""
    n = adj_ok.shape[0]
    match_r = -np.ones(n, dtype=np.int64)

    def try_kuhn(u, visited):
        for v in range(n):
            if adj_ok[u, v] and not visited[v]:
                visited[v] = True
                if match_r[v] == -1 or try_kuhn(match_r[v], visited):
                    match_r[v] = u
                    return True
        return False

    matched = 0
    for u in range(n):
        if try_kuhn(u, np.zeros(n, dtype=bool)):
            matched += 1
    return matched == n


def _bottleneck_assignment(A):
    """Exact bottleneck assignment: binary search over candidate costs +
    perfect-matching feasibility check (same decision procedure hera uses)."""
    vals = np.unique(A)
    lo, hi = 0, len(vals) - 1
    while lo < hi:
        mid = (lo + hi) // 2
        if _has_perfect_matching(A <= vals[mid]):
            hi = mid
        else:
            lo = mid + 1
    return float(vals[lo])


def bottleneck_layer_hera(dgm0, dgm1, *, min_pallas_points=64):
    """Forward pass of BottleneckLayerHera. Returns a scalar jnp.float32.

    min_pallas_points: below this diagram size the cost matrix is built with
    numpy (launch + transfer overhead dominates); set to 0 to force the Pallas
    path.
    """
    d0 = _remove_zero_bars(dgm0)
    d1 = _remove_zero_bars(dgm1)
    n0, n1 = len(d0), len(d1)
    if n0 == 0 and n1 == 0:
        return jnp.float32(0.0)

    # L-inf distance of each point to the diagonal: (death - birth) / 2.
    # O(N + M) trivial work -> host (avoids width-1 masked-store outputs).
    diag0 = 0.5 * (d0[:, 1] - d0[:, 0])
    diag1 = 0.5 * (d1[:, 1] - d1[:, 0])

    if n0 > 0 and n1 > 0:
        if max(n0, n1) < min_pallas_points:
            # Small-diagram fast path: per-pallas_call overhead dwarfs the work.
            cost = np.maximum(
                np.abs(d0[:, None, 0] - d1[None, :, 0]),
                np.abs(d0[:, None, 1] - d1[None, :, 1]),
            ).astype(np.float32)
        else:
            # Lane-dense, pipelined tile sizes: multiples of (8, 128), capped so
            # 2x double-buffered output tiles stay well inside v5e's 16 MiB
            # scoped VMEM and v7x's 64 MiB physical VMEM.
            TM_MAX, TN_MAX = 512, 2048
            tm = min(TM_MAX, _round_up(n0, 8))
            tn = min(TN_MAX, _round_up(n1, 128))
            npad = _round_up(n0, tm)
            mpad = _round_up(n1, tn)

            d0_pad = np.zeros((npad, 2), np.float32)
            d0_pad[:n0] = d0
            d1t_pad = np.zeros((2, mpad), np.float32)
            d1t_pad[:, :n1] = d1.T

            cost_dev = _pairwise_linf_cost(
                jnp.asarray(d0_pad), jnp.asarray(d1t_pad), tm, tn)
            # Slice on device so only the valid region is transferred back.
            # (Padded rows/cols are garbage by construction and never used.)
            cost = np.asarray(cost_dev[:n0, :n1])
    else:
        cost = np.zeros((n0, n1), np.float32)

    # Augmented square cost matrix: rows = D0 points + diagonal copies,
    # cols = D1 points + diagonal copies (standard bottleneck reduction).
    N = n0 + n1
    A = np.zeros((N, N), np.float32)
    A[:n0, :n1] = cost
    if n0 > 0:
        A[:n0, n1:] = diag0[:, None]
    if n1 > 0:
        A[n0:, :n1] = diag1[None, :]

    # TODO(synk): hera's combinatorial matching (binary search + augmenting
    # paths) has no clean Pallas equivalent; it runs on host over the
    # kernel-computed cost matrix.
    dist = _bottleneck_assignment(A)
    return jnp.float32(dist)


# ----------------------------------------------------------------------------
# References
# ----------------------------------------------------------------------------
def _brute_force_bottleneck(dgm0, dgm1):
    from itertools import permutations
    d0 = _remove_zero_bars(dgm0)
    d1 = _remove_zero_bars(dgm1)
    n0, n1 = len(d0), len(d1)
    N = n0 + n1
    A = np.zeros((N, N), np.float64)
    for i in range(n0):
        for j in range(n1):
            A[i, j] = max(abs(d0[i, 0] - d1[j, 0]), abs(d0[i, 1] - d1[j, 1]))
    for i in range(n0):
        A[i, n1:] = 0.5 * (d0[i, 1] - d0[i, 0])
    for j in range(n1):
        A[n0:, j] = 0.5 * (d1[j, 1] - d1[j, 0])
    best = np.inf
    for perm in permutations(range(N)):
        best = min(best, max(A[r, perm[r]] for r in range(N)))
    return best


def _numpy_cross_cost(d0, d1):
    return np.maximum(
        np.abs(d0[:, None, 0] - d1[None, :, 0]),
        np.abs(d0[:, None, 1] - d1[None, :, 1]),
    ).astype(np.float32)


if __name__ == "__main__":
    key = jax.random.PRNGKey(0)
    k0, k1, k2, k3, k4, k5 = jax.random.split(key, 6)

    # ---- Small end-to-end test (forces the Pallas path, verified vs brute force)
    n0_raw, n1_raw = 5, 5
    b0 = jax.random.uniform(k0, (n0_raw,), minval=0.0, maxval=1.0)
    l0 = jax.random.uniform(k1, (n0_raw,), minval=0.05, maxval=1.0)
    b1 = jax.random.uniform(k2, (n1_raw,), minval=0.0, maxval=1.0)
    l1 = jax.random.uniform(k3, (n1_raw,), minval=0.05, maxval=1.0)

    dgm0 = np.stack([np.asarray(b0), np.asarray(b0 + l0)], axis=1).astype(np.float32)
    dgm1 = np.stack([np.asarray(b1), np.asarray(b1 + l1)], axis=1).astype(np.float32)
    dgm0[2, 1] = dgm0[2, 0]   # zero bar -> removed by remove_zero_bars
    dgm1[4, 1] = dgm1[4, 0]   # zero bar -> removed by remove_zero_bars

    dist = bottleneck_layer_hera(dgm0, dgm1, min_pallas_points=0)
    dist = jax.block_until_ready(dist)

    ref = _brute_force_bottleneck(dgm0, dgm1)
    assert np.isfinite(float(dist))
    np.testing.assert_allclose(float(dist), ref, rtol=1e-5, atol=1e-6)

    # ---- Multi-tile kernel check (tiling + padding) vs numpy cost matrix
    nA, nB = 600, 300
    ptsA = np.asarray(jax.random.uniform(k4, (nA, 2), minval=0.0, maxval=1.0))
    ptsB = np.asarray(jax.random.uniform(k5, (nB, 2), minval=0.0, maxval=1.0))
    dA = np.stack([ptsA[:, 0], ptsA[:, 0] + ptsA[:, 1] + 0.01], axis=1).astype(np.float32)
    dB = np.stack([ptsB[:, 0], ptsB[:, 0] + ptsB[:, 1] + 0.01], axis=1).astype(np.float32)

    tm = min(512, _round_up(nA, 8))
    tn = min(2048, _round_up(nB, 128))
    npad = _round_up(nA, tm)
    mpad = _round_up(nB, tn)
    dA_pad = np.zeros((npad, 2), np.float32); dA_pad[:nA] = dA
    dBt_pad = np.zeros((2, mpad), np.float32); dBt_pad[:, :nB] = dB.T
    cost_dev = _pairwise_linf_cost(jnp.asarray(dA_pad), jnp.asarray(dBt_pad), tm, tn)
    cost_dev = jax.block_until_ready(cost_dev)
    np.testing.assert_allclose(
        np.asarray(cost_dev[:nA, :nB]), _numpy_cross_cost(dA, dB), rtol=1e-6, atol=1e-6)

    print("KERNEL_OK")
</pallas_src>

<mosaic_0001>
module attributes {stable_mosaic.version = 11 : i64} {
  func.func @_cost_tile_kernel(%arg0: i32, %arg1: i32, %arg2: memref<8x2xf32, #tpu.memory_space<vmem>>, %arg3: memref<2x128xf32, #tpu.memory_space<vmem>>, %arg4: memref<8x128xf32, #tpu.memory_space<vmem>>) attributes {dimension_semantics = [#tpu.dimension_semantics<parallel>, #tpu.dimension_semantics<parallel>], iteration_bounds = array<i64: 1, 1>, scalar_prefetch = 0 : i64, scratch_operands = 0 : i64, tpu.core_type = #tpu.core_type<tc>, window_params = [{transform_indices = @transform_0, window_bounds = array<i64: 8, 2>}, {transform_indices = @transform_1, window_bounds = array<i64: 2, 128>}, {transform_indices = @transform_2, window_bounds = array<i64: 8, 128>}]} {
    %c0 = arith.constant 0 : index
    %c0_0 = arith.constant 0 : index
    %0 = vector.load %arg2[%c0, %c0_0] : memref<8x2xf32, #tpu.memory_space<vmem>>, vector<8x1xf32>
    %c0_1 = arith.constant 0 : index
    %c1 = arith.constant 1 : index
    %1 = vector.load %arg2[%c0_1, %c1] : memref<8x2xf32, #tpu.memory_space<vmem>>, vector<8x1xf32>
    %c0_2 = arith.constant 0 : index
    %c0_3 = arith.constant 0 : index
    %2 = vector.load %arg3[%c0_2, %c0_3] : memref<2x128xf32, #tpu.memory_space<vmem>>, vector<1x128xf32>
    %c1_4 = arith.constant 1 : index
    %c0_5 = arith.constant 0 : index
    %3 = vector.load %arg3[%c1_4, %c0_5] : memref<2x128xf32, #tpu.memory_space<vmem>>, vector<1x128xf32>
    %4 = vector.broadcast %0 : vector<8x1xf32> to vector<8x128xf32>
    %5 = vector.broadcast %2 : vector<1x128xf32> to vector<8x128xf32>
    %6 = arith.subf %4, %5 : vector<8x128xf32>
    %7 = math.absf %6 : vector<8x128xf32>
    %8 = vector.broadcast %1 : vector<8x1xf32> to vector<8x128xf32>
    %9 = vector.broadcast %3 : vector<1x128xf32> to vector<8x128xf32>
    %10 = arith.subf %8, %9 : vector<8x128xf32>
    %11 = math.absf %10 : vector<8x128xf32>
    %12 = arith.maximumf %7, %11 : vector<8x128xf32>
    %c0_6 = arith.constant 0 : index
    %c0_7 = arith.constant 0 : index
    %13 = vector.load %arg4[%c0_6, %c0_7] : memref<8x128xf32, #tpu.memory_space<vmem>>, vector<8x128xf32>
    tpu.vector_store %arg4[%c0_6, %c0_7], %12 {strides = array<i32>} : memref<8x128xf32, #tpu.memory_space<vmem>>, vector<8x128xf32>,
    return
  }
  func.func @transform_0(%arg0: i32, %arg1: i32) -> (i32, i32) {
    %c0_i32 = arith.constant 0 : i32
    %c0_i32_0 = arith.constant 0 : i32
    return %arg0, %c0_i32 : i32, i32
  }
  func.func @transform_1(%arg0: i32, %arg1: i32) -> (i32, i32) {
    %c0_i32 = arith.constant 0 : i32
    %c0_i32_0 = arith.constant 0 : i32
    return %c0_i32, %arg1 : i32, i32
  }
  func.func @transform_2(%arg0: i32, %arg1: i32) -> (i32, i32) {
    %c0_i32 = arith.constant 0 : i32
    return %arg0, %arg1 : i32, i32
  }
}

</mosaic_0001>

<llo_original>
// kernel: tpu_custom_call.1
$region0: #{tpu_custom_call.1}
  #allocation0 [shape = 'u32[]', space=smem, size = 0x4, offset = 0x4, fixed_abs, tag = 'smem constant byte address 0x4 - core index']
  #allocation1 [shape = 'u32[144,128]{1,0:T(1,128)}', space=vmem, size = 0x12000, scoped, tag = 'internal scratch']
  %s0 = inlined_call_operand.vmem [shape: f32[8,2], index: 0, kind: input, shape index: {}]
  %s1 = inlined_call_operand.vmem [shape: f32[2,128], index: 1, kind: input, shape index: {}]
  %s2 = inlined_call_operand.hbm [shape: f32[8,128], index: 2, kind: output, shape index: {}]
  %s3 = sld [smem:[#allocation0]]
  $region18: #{tpu_custom_call.1} parent=0
    _
  %s5 = ssub.s32 1, %s3
  %s6 = scalar_select 0, %s5, %s3
  $region1: #{tpu_custom_call.1} parent=0
    #allocation2 [shape = 'u8[4096]{0}', space=vmem, size = 0x1000, scoped, tag = 'output window, operand 0, single buffered']
    #allocation3 [shape = 's32[1]{0}', space=sflag, size = 0x4, scoped, tag = 'scoped memory for tpu_custom_call.1']
    %7 = vsyncpa [#allocation3], 0
    // Predicated region
    $region2: #{tpu_custom_call.1} parent=1 // pred_check
      _
    $region3: #{tpu_custom_call.1} parent=1 // pred_check_branch
      %9 = sbr.rel (0) target = $region5
    $region4: #{tpu_custom_call.1} parent=1 // pred_region
      _
    $region5: #{tpu_custom_call.1} parent=1 // pred_fallthru
      _
    // Predicated region
    $region6: #{tpu_custom_call.1} parent=1 // pred_check
      _
    $region7: #{tpu_custom_call.1} parent=1 // pred_check_branch
      %11 = sbr.rel (0) target = $region9
    $region8: #{tpu_custom_call.1} parent=1 // pred_region
      _
    $region9: #{tpu_custom_call.1} parent=1 // pred_fallthru
      _
    %v12 = vld [vmem:[%s0] sm:$0xff]
    %v13 = vld [vmem:[%s1] sm:$0x1]
    %v14 = vld [vmem:[%s1 + $0x1] sm:$0x1]
    %16 = vset.pattern.permute.xlu0 0
    %17 = vperm.xlu0 %16, %v12
    %v18 = vpop.permute.xlu0 %17
    %v20 = vlaneseq
    %v21 = vshrl.u32 %v20, 7
    %v22 = vsub.s32 0, %v21
    %v23 = vrot.slane %v13, %v22
    %v24 = vsub.f32 %v18, %v23
    %v25 = vand.u32 2147483647, %v24
    %26 = vset.pattern.permute.xlu0 1
    %27 = vperm.xlu0 %26, %v12
    %v28 = vpop.permute.xlu0 %27
    %v30 = vlaneseq
    %v31 = vshrl.u32 %v30, 7
    %v32 = vsub.s32 0, %v31
    %v33 = vrot.slane %v14, %v32
    %v34 = vsub.f32 %v28, %v33
    %v35 = vand.u32 2147483647, %v34
    %v36 = vmax.f32 %v25, %v35
    %37 = vst [vmem:[#allocation2] sm:$0xff] %v36
    // Predicated region
    $region10: #{tpu_custom_call.1} parent=1 // pred_check
      _
    $region11: #{tpu_custom_call.1} parent=1 // pred_check_branch
      %39 = sbr.rel (0) target = $region13
    $region12: #{tpu_custom_call.1} parent=1 // pred_region
      %s41 = ssub.s32 128, 128
      %42 = vsyncadd [#allocation3], %s41
      %s44 = sshll.u32 [#allocation2], 4
      %s45 = int_to_ptr.vmem [resolvable:$true] %s44
      %47 = dma.vmem_to_hbm [thread:$0]  %s45, 128, %s2, [#allocation3]
    $region13: #{tpu_custom_call.1} parent=1 // pred_fallthru
      _
    // Predicated region
    $region14: #{tpu_custom_call.1} parent=1 // pred_check
      _
    $region15: #{tpu_custom_call.1} parent=1 // pred_check_branch
      %49 = sbr.rel (0) target = $region17
    $region16: #{tpu_custom_call.1} parent=1 // pred_region
      %50 = dma.done [#allocation3], 128
    $region17: #{tpu_custom_call.1} parent=1 // pred_fallthru
      _
    %51 = vsyncpa [#allocation3], 1

</llo_original>
